<compile_context>
chip_gen: v7x
topology: tpu7x:2x2x1
jax: 0.10.0
libtpu: 0.0.40
codegen_flags: <defaults>
</compile_context>

<pallas_src>
import functools
import math

import jax
import jax.numpy as jnp
from jax import lax
from jax.experimental import pallas as pl
from jax.experimental.pallas import tpu as pltpu


_F32_INF_BITS = 0x7F800000  # bit pattern of +inf; |x| bit patterns are <= this


def _topk_abs_small_k_kernel(x_ref, o_ref, *, topk: int):
    """k rounds of masked row-max; keeps the per-row top-`topk` by |x|."""
    x = x_ref[...]
    # f32 compare/reduce path: exact and safe on v5e (no bf16 VALU).
    # TODO(synk): a bf16 compare path (2x VPU throughput on v6e/v7x) needs an
    # exactness-preserving refinement at the threshold boundary; kept f32 for
    # bit-exact parity with torch.topk-derived outputs.
    absx = jnp.abs(x).astype(jnp.float32)
    neg_inf = jnp.float32(-jnp.inf)

    # m_i = i-th largest |x| per row.  Re-masking against the resident absx
    # tile each round avoids materializing/storing a tile-sized `work` carry
    # through VMEM every round.  The whole row-tile is processed per round so
    # many independent rows hide the serial XLU reduce-chain latency (an 8-row
    # strip loop would be latency-bound on the per-round cross-lane reduce).
    m = jnp.max(absx, axis=-1, keepdims=True)
    for _ in range(topk - 1):               # small static k -> fully unrolled
        m = jnp.max(jnp.where(absx < m, absx, neg_inf), axis=-1, keepdims=True)

    # TODO(synk): exact |x| ties at rank k keep every tied element, whereas
    # torch.topk keeps exactly k (index tie-break).
    # TODO(synk): a NaN in a row poisons jnp.max and zeroes the whole row;
    # torch.topk treats NaN as the largest element.
    o_ref[...] = jnp.where(absx >= m, x, jnp.zeros_like(x))


def _topk_abs_counting_kernel(x_ref, o_ref, *, topk: int):
    """Counting binary search on the |x| bit pattern; ~31 rounds for any k."""
    x = x_ref[...]
    absx = jnp.abs(x).astype(jnp.float32)
    # |x| >= 0, so its int32 bit pattern is non-negative and monotone in value.
    bits = pltpu.bitcast(absx, jnp.int32)
    rows = x.shape[0]
    kf = jnp.float32(topk)                  # f32 lane-sum is exact for cols < 2**24

    lo0 = jnp.zeros((rows, 1), jnp.int32)                      # count(>= lo) >= k
    hi0 = jnp.full((rows, 1), _F32_INF_BITS + 1, jnp.int32)    # count(>= hi) <  k

    def body(_, carry):
        lo, hi = carry
        mid = lo + (hi - lo) // 2
        cnt = jnp.sum((bits >= mid).astype(jnp.float32), axis=-1, keepdims=True)
        ge = cnt >= kf
        return jnp.where(ge, mid, lo), jnp.where(ge, hi, mid)

    # 31 rolled rounds pin `lo` to the bit pattern of the k-th largest |x|.
    lo, _ = lax.fori_loop(0, 31, body, (lo0, hi0))
    o_ref[...] = jnp.where(bits >= lo, x, jnp.zeros_like(x))


def _vmem_capacity_bytes() -> int:
    try:
        cap = getattr(pltpu.get_tpu_info(), "vmem_capacity_bytes", None)
        if cap:
            return int(cap)
    except Exception:
        pass
    return 128 * 1024 * 1024                # v5e/v6e default


def _choose_tiling(rows: int, cols_p: int):
    """Byte-bounded, generation-aware row tiling -> (tile_r, grid, vmem_limit)."""
    vmem_cap = _vmem_capacity_bytes()
    # v5e/v6e (128 MiB physical): ~80 MiB limit, ~8 MiB tiles.
    # v7x (64 MiB per TC):        ~40 MiB limit, ~4 MiB tiles.
    vmem_limit = min((vmem_cap * 5) // 8, 96 * 1024 * 1024)
    target_tile_bytes = min(vmem_limit // 10, 8 * 1024 * 1024)

    # Budget in f32 bytes: in-kernel temps are f32 regardless of input dtype.
    bytes_per_8rows = 8 * cols_p * 4
    max_tile_rows = max(8, (target_tile_bytes // bytes_per_8rows) * 8)

    if rows <= 8:
        tile_r = rows                       # full first dim -> always legal
    else:
        # Keep >= ~8 grid steps when rows permit: restores DMA/compute overlap
        # and gives v7x's two TensorCores >= 2 blocks each on the parallel axis.
        rows_for_steps = max(8, ((rows // 8) // 8) * 8)
        tile_r = max(8, min(max_tile_rows, rows_for_steps))
    grid = pl.cdiv(rows, tile_r)

    # ~2x double-buffered input + 2x output + ~3 f32 temps per live tile.
    needed = 8 * tile_r * cols_p * 4
    if needed > vmem_limit:
        # Row tiles cannot shrink below 8 sublanes; raise the limit toward the
        # physical capacity for very wide rows.
        # TODO(synk): two-pass column-chunked scheme (threshold pass over a grid
        # reduction axis + apply pass) for rows wider than VMEM.
        vmem_limit = max(vmem_limit, min(needed, (vmem_cap * 9) // 10))
    return tile_r, grid, int(vmem_limit)


def topk_absolutes_2d(x: jax.Array, topk: int) -> jax.Array:
    """Pallas TPU implementation of topk_absolutes_2d(input_, topk)."""
    topk = int(topk)
    orig_shape = x.shape
    rows = orig_shape[0]
    cols = int(math.prod(orig_shape[1:])) if len(orig_shape) > 1 else 1
    if topk < 1:
        raise ValueError(f"topk must be >= 1, got {topk}")
    if topk > cols:
        raise ValueError(f"topk={topk} exceeds the {cols} features per sample")

    x2 = x.reshape(rows, cols)
    # Pad the feature dim to a multiple of 128 so output stores stay lane-dense
    # (zero padding cannot perturb the top-k threshold; pad is sliced off).
    cols_p = ((cols + 127) // 128) * 128
    if cols_p != cols:
        x2 = jnp.pad(x2, ((0, 0), (0, cols_p - cols)))

    tile_r, grid_r, vmem_limit = _choose_tiling(rows, cols_p)

    body = _topk_abs_small_k_kernel if topk <= 16 else _topk_abs_counting_kernel
    kernel = functools.partial(body, topk=topk)

    out = pl.pallas_call(
        kernel,
        out_shape=jax.ShapeDtypeStruct((rows, cols_p), x.dtype),
        grid_spec=pltpu.PrefetchScalarGridSpec(
            num_scalar_prefetch=0,
            grid=(grid_r,),
            in_specs=[pl.BlockSpec((tile_r, cols_p), lambda i: (i, 0))],
            out_specs=pl.BlockSpec((tile_r, cols_p), lambda i: (i, 0)),
        ),
        compiler_params=pltpu.CompilerParams(
            dimension_semantics=("parallel",),
            vmem_limit_bytes=vmem_limit,
        ),
    )(x2)

    if cols_p != cols:
        out = out[:, :cols]
    return out.reshape(orig_shape)


if __name__ == "__main__":
    key = jax.random.PRNGKey(0)

    def ref_topk(xa, k):
        xf = xa.reshape(xa.shape[0], -1)
        absf = jnp.abs(xf)
        kth = jnp.sort(absf, axis=-1)[:, -k][:, None]
        return jnp.where(absf >= kth, xf, 0.0).astype(xa.dtype).reshape(xa.shape)

    cases = [
        ((2, 4, 16, 16), 5),    # small-k unrolled path, 128-aligned cols
        ((16, 8, 8, 8), 20),    # counting bit-bisection path, multi-step grid
        ((4, 3, 5, 11), 7),     # small-k path with lane padding (cols=165 -> 256)
    ]
    for idx, (shape, k) in enumerate(cases):
        key, sub = jax.random.split(key)
        x = jax.random.normal(sub, shape, dtype=jnp.float32)
        y = jax.block_until_ready(topk_absolutes_2d(x, k))
        r = ref_topk(x, k)
        assert y.shape == x.shape and y.dtype == x.dtype, f"case {idx}: shape/dtype"
        nz = jnp.sum(y.reshape(shape[0], -1) != 0, axis=-1)
        assert bool(jnp.all(nz == k)), f"case {idx}: wrong number of kept elements"
        assert bool(jnp.array_equal(y, r)), f"case {idx}: mismatch vs reference"
    print("KERNEL_OK")
</pallas_src>

<mosaic_0001>
module attributes {stable_mosaic.version = 11 : i64} {
  func.func @_topk_abs_small_k_kernel(%arg0: i32, %arg1: memref<2x1024xf32, #tpu.memory_space<vmem>>, %arg2: memref<2x1024xf32, #tpu.memory_space<vmem>>) attributes {dimension_semantics = [#tpu.dimension_semantics<parallel>], iteration_bounds = array<i64: 1>, scalar_prefetch = 0 : i64, scratch_operands = 0 : i64, tpu.core_type = #tpu.core_type<tc>, window_params = [{transform_indices = @transform_0, window_bounds = array<i64: 2, 1024>}, {transform_indices = @transform_1, window_bounds = array<i64: 2, 1024>}]} {
    %c0 = arith.constant 0 : index
    %c0_0 = arith.constant 0 : index
    %0 = vector.load %arg1[%c0, %c0_0] : memref<2x1024xf32, #tpu.memory_space<vmem>>, vector<2x1024xf32>
    %1 = math.absf %0 : vector<2x1024xf32>
    %cst = arith.constant dense<0xFF800000> : vector<2xf32>
    %2 = vector.multi_reduction <maximumf>, %1, %cst [1] : vector<2x1024xf32> to vector<2xf32>
    %3 = vector.shape_cast %2 : vector<2xf32> to vector<2x1xf32>
    %4 = vector.broadcast %3 : vector<2x1xf32> to vector<2x1024xf32>
    %5 = arith.cmpf olt, %1, %4 : vector<2x1024xf32>
    %cst_1 = arith.constant 0xFF800000 : f32
    %6 = vector.broadcast %cst_1 : f32 to vector<2x1024xf32>
    %7 = arith.select %5, %1, %6 : vector<2x1024xi1>, vector<2x1024xf32>
    %cst_2 = arith.constant dense<0xFF800000> : vector<2xf32>
    %8 = vector.multi_reduction <maximumf>, %7, %cst_2 [1] : vector<2x1024xf32> to vector<2xf32>
    %9 = vector.shape_cast %8 : vector<2xf32> to vector<2x1xf32>
    %10 = vector.broadcast %9 : vector<2x1xf32> to vector<2x1024xf32>
    %11 = arith.cmpf olt, %1, %10 : vector<2x1024xf32>
    %cst_3 = arith.constant 0xFF800000 : f32
    %12 = vector.broadcast %cst_3 : f32 to vector<2x1024xf32>
    %13 = arith.select %11, %1, %12 : vector<2x1024xi1>, vector<2x1024xf32>
    %cst_4 = arith.constant dense<0xFF800000> : vector<2xf32>
    %14 = vector.multi_reduction <maximumf>, %13, %cst_4 [1] : vector<2x1024xf32> to vector<2xf32>
    %15 = vector.shape_cast %14 : vector<2xf32> to vector<2x1xf32>
    %16 = vector.broadcast %15 : vector<2x1xf32> to vector<2x1024xf32>
    %17 = arith.cmpf olt, %1, %16 : vector<2x1024xf32>
    %cst_5 = arith.constant 0xFF800000 : f32
    %18 = vector.broadcast %cst_5 : f32 to vector<2x1024xf32>
    %19 = arith.select %17, %1, %18 : vector<2x1024xi1>, vector<2x1024xf32>
    %cst_6 = arith.constant dense<0xFF800000> : vector<2xf32>
    %20 = vector.multi_reduction <maximumf>, %19, %cst_6 [1] : vector<2x1024xf32> to vector<2xf32>
    %21 = vector.shape_cast %20 : vector<2xf32> to vector<2x1xf32>
    %22 = vector.broadcast %21 : vector<2x1xf32> to vector<2x1024xf32>
    %23 = arith.cmpf olt, %1, %22 : vector<2x1024xf32>
    %cst_7 = arith.constant 0xFF800000 : f32
    %24 = vector.broadcast %cst_7 : f32 to vector<2x1024xf32>
    %25 = arith.select %23, %1, %24 : vector<2x1024xi1>, vector<2x1024xf32>
    %cst_8 = arith.constant dense<0xFF800000> : vector<2xf32>
    %26 = vector.multi_reduction <maximumf>, %25, %cst_8 [1] : vector<2x1024xf32> to vector<2xf32>
    %27 = vector.shape_cast %26 : vector<2xf32> to vector<2x1xf32>
    %28 = vector.broadcast %27 : vector<2x1xf32> to vector<2x1024xf32>
    %29 = arith.cmpf oge, %1, %28 : vector<2x1024xf32>
    %cst_9 = arith.constant 0.000000e+00 : f32
    %30 = vector.broadcast %cst_9 : f32 to vector<2x1024xf32>
    %31 = arith.select %29, %0, %30 : vector<2x1024xi1>, vector<2x1024xf32>
    %c0_10 = arith.constant 0 : index
    %c0_11 = arith.constant 0 : index
    %32 = vector.load %arg2[%c0_10, %c0_11] : memref<2x1024xf32, #tpu.memory_space<vmem>>, vector<2x1024xf32>
    tpu.vector_store %arg2[%c0_10, %c0_11], %31 {strides = array<i32>} : memref<2x1024xf32, #tpu.memory_space<vmem>>, vector<2x1024xf32>,
    return
  }
  func.func @transform_0(%arg0: i32) -> (i32, i32) {
    %c0_i32 = arith.constant 0 : i32
    %c0_i32_0 = arith.constant 0 : i32
    return %arg0, %c0_i32 : i32, i32
  }
  func.func @transform_1(%arg0: i32) -> (i32, i32) {
    %c0_i32 = arith.constant 0 : i32
    %c0_i32_0 = arith.constant 0 : i32
    return %arg0, %c0_i32 : i32, i32
  }
}

</mosaic_0001>

<llo_original>
// kernel: tpu_custom_call.1
$region0: #{tpu_custom_call.1}
  #allocation0 [shape = 'u32[]', space=smem, size = 0x4, offset = 0x4, fixed_abs, tag = 'smem constant byte address 0x4 - core index']
  #allocation1 [shape = 'u32[144,128]{1,0:T(1,128)}', space=vmem, size = 0x12000, scoped, tag = 'internal scratch']
  %s0 = inlined_call_operand.hbm [shape: f32[2,1024], index: 0, kind: input, shape index: {}]
  %s1 = inlined_call_operand.hbm [shape: f32[2,1024], index: 1, kind: output, shape index: {}]
  %s2 = sld [smem:[#allocation0]]
  $region18: #{tpu_custom_call.1} parent=0
    _
  %s4 = ssub.s32 1, %s2
  %s5 = scalar_select 0, %s4, %s2
  $region1: #{tpu_custom_call.1} parent=0
    #allocation2 [shape = 'u8[8192]{0}', space=vmem, size = 0x2000, scoped, tag = 'input window, operand 0, single buffered']
    #allocation3 [shape = 's32[1]{0}', space=sflag, size = 0x4, scoped, tag = 'scoped memory for tpu_custom_call.1']
    #allocation4 [shape = 's32[1]{0}', space=sflag, size = 0x4, scoped, tag = 'scoped memory for tpu_custom_call.1']
    #allocation5 [shape = 'u8[8192]{0}', space=vmem, size = 0x2000, scoped, tag = 'output window, operand 0, single buffered']
    %6 = vsyncpa [#allocation3], 0
    %7 = vsyncpa [#allocation4], 0
    // Predicated region
    $region2: #{tpu_custom_call.1} parent=1 // pred_check
      _
    $region3: #{tpu_custom_call.1} parent=1 // pred_check_branch
      %9 = sbr.rel (0) target = $region5
    $region4: #{tpu_custom_call.1} parent=1 // pred_region
      %s11 = ssub.s32 256, 256
      %12 = vsyncadd [#allocation3], %s11
      %s14 = sshll.u32 [#allocation2], 4
      %s15 = int_to_ptr.vmem [resolvable:$true] %s14
      %17 = dma.hbm_to_vmem [thread:$0]  %s0, 256, %s15, [#allocation3]
    $region5: #{tpu_custom_call.1} parent=1 // pred_fallthru
      _
    // Predicated region
    $region6: #{tpu_custom_call.1} parent=1 // pred_check
      _
    $region7: #{tpu_custom_call.1} parent=1 // pred_check_branch
      %19 = sbr.rel (0) target = $region9
    $region8: #{tpu_custom_call.1} parent=1 // pred_region
      %20 = dma.done [#allocation3], 256
    $region9: #{tpu_custom_call.1} parent=1 // pred_fallthru
      _
    %v21 = vld [vmem:[#allocation2] sm:$0xff]
    %v22 = vld [vmem:[#allocation2 + $0x8] sm:$0xff]
    %v23 = vand.u32 2147483647, %v21
    %v24 = vand.u32 2147483647, %v22
    %v27 = vcombine.high %v23, %v23
    %v29 = vunpack.c.l.s4 1983009808
    %v30 = vunpack.c.0.s8 %v29
    %v31 = vlaneseq
    %v32 = vshrl.u32 %v31, 7
    %v33 = vsub.s32 %v30, %v32
    %v34 = vrot.slane %v23, %v33
    %v36 = vunpack.c.l.s4 1983009808
    %v37 = vunpack.c.0.s8 %v36
    %v38 = vlaneseq
    %v39 = vshrl.u32 %v38, 7
    %v40 = vsub.s32 %v37, %v39
    %v41 = vrot.slane %v27, %v40
    %v42 = vcombine.high %v34, %v34
    %v43 = vcombine.high %v41, %v41
    %v44 = vcombine.high %v24, %v24
    %v46 = vunpack.c.l.s4 1983009808
    %v47 = vunpack.c.0.s8 %v46
    %v48 = vlaneseq
    %v49 = vshrl.u32 %v48, 7
    %v50 = vsub.s32 %v47, %v49
    %v51 = vrot.slane %v24, %v50
    %v53 = vunpack.c.l.s4 1983009808
    %v54 = vunpack.c.0.s8 %v53
    %v55 = vlaneseq
    %v56 = vshrl.u32 %v55, 7
    %v57 = vsub.s32 %v54, %v56
    %v58 = vrot.slane %v44, %v57
    %v59 = vcombine.high %v51, %v51
    %v60 = vcombine.high %v58, %v58
    %vm69 = vcmask 1041408
    %v70 = vsel %vm69, %v34, -inf
    %v71 = vsel %vm69, %v42, -inf
    %v72 = vsel %vm69, %v41, -inf
    %v73 = vsel %vm69, %v43, -inf
    %v74 = vsel %vm69, %v51, -inf
    %v75 = vmax.f32 %v70, %v74
    %v76 = vsel %vm69, %v59, -inf
    %v77 = vmax.f32 %v71, %v76
    %v78 = vsel %vm69, %v58, -inf
    %v79 = vmax.f32 %v72, %v78
    %v80 = vsel %vm69, %v60, -inf
    %v81 = vmax.f32 %v73, %v80
    %v82 = vmax.f32 %v75, %v77
    %v83 = vmax.f32 %v79, %v81
    %v84 = vmax.f32 %v82, %v83
    %85 = vmax.xlane.f32.xlu0 %v84
    %v86 = vpop.xlane.xlu0 %85
    %v89 = vunpack.c.l.s4 269488144
    %v90 = vunpack.c.0.s8 %v89
    %v91 = vlaneseq
    %v92 = vshrl.u32 %v91, 7
    %v93 = vsub.s32 %v90, %v92
    %v94 = vrot.slane %v86, %v93
    %vm96 = vcmp.lt.f32.partialorder %v23, %v94
    %vm97 = vcmp.lt.f32.partialorder %v24, %v94
    %v98 = vsel %vm96, %v23, -inf
    %v99 = vsel %vm97, %v24, -inf
    %v102 = vcombine.high %v98, %v98
    %v104 = vunpack.c.l.s4 1983009808
    %v105 = vunpack.c.0.s8 %v104
    %v106 = vlaneseq
    %v107 = vshrl.u32 %v106, 7
    %v108 = vsub.s32 %v105, %v107
    %v109 = vrot.slane %v98, %v108
    %v111 = vunpack.c.l.s4 1983009808
    %v112 = vunpack.c.0.s8 %v111
    %v113 = vlaneseq
    %v114 = vshrl.u32 %v113, 7
    %v115 = vsub.s32 %v112, %v114
    %v116 = vrot.slane %v102, %v115
    %v117 = vcombine.high %v109, %v109
    %v118 = vcombine.high %v116, %v116
    %v119 = vcombine.high %v99, %v99
    %v121 = vunpack.c.l.s4 1983009808
    %v122 = vunpack.c.0.s8 %v121
    %v123 = vlaneseq
    %v124 = vshrl.u32 %v123, 7
    %v125 = vsub.s32 %v122, %v124
    %v126 = vrot.slane %v99, %v125
    %v128 = vunpack.c.l.s4 1983009808
    %v129 = vunpack.c.0.s8 %v128
    %v130 = vlaneseq
    %v131 = vshrl.u32 %v130, 7
    %v132 = vsub.s32 %v129, %v131
    %v133 = vrot.slane %v119, %v132
    %v134 = vcombine.high %v126, %v126
    %v135 = vcombine.high %v133, %v133
    %v144 = vsel %vm69, %v109, -inf
    %v145 = vsel %vm69, %v117, -inf
    %v146 = vsel %vm69, %v116, -inf
    %v147 = vsel %vm69, %v118, -inf
    %v148 = vsel %vm69, %v126, -inf
    %v149 = vmax.f32 %v144, %v148
    %v150 = vsel %vm69, %v134, -inf
    %v151 = vmax.f32 %v145, %v150
    %v152 = vsel %vm69, %v133, -inf
    %v153 = vmax.f32 %v146, %v152
    %v154 = vsel %vm69, %v135, -inf
    %v155 = vmax.f32 %v147, %v154
    %v156 = vmax.f32 %v149, %v151
    %v157 = vmax.f32 %v153, %v155
    %v158 = vmax.f32 %v156, %v157
    %159 = vmax.xlane.f32.xlu0 %v158
    %v160 = vpop.xlane.xlu0 %159
    %v163 = vunpack.c.l.s4 269488144
    %v164 = vunpack.c.0.s8 %v163
    %v165 = vlaneseq
    %v166 = vshrl.u32 %v165, 7
    %v167 = vsub.s32 %v164, %v166
    %v168 = vrot.slane %v160, %v167
    %vm170 = vcmp.lt.f32.partialorder %v23, %v168
    %vm171 = vcmp.lt.f32.partialorder %v24, %v168
    %v172 = vsel %vm170, %v23, -inf
    %v173 = vsel %vm171, %v24, -inf
    %v176 = vcombine.high %v172, %v172
    %v178 = vunpack.c.l.s4 1983009808
    %v179 = vunpack.c.0.s8 %v178
    %v180 = vlaneseq
    %v181 = vshrl.u32 %v180, 7
    %v182 = vsub.s32 %v179, %v181
    %v183 = vrot.slane %v172, %v182
    %v185 = vunpack.c.l.s4 1983009808
    %v186 = vunpack.c.0.s8 %v185
    %v187 = vlaneseq
    %v188 = vshrl.u32 %v187, 7
    %v189 = vsub.s32 %v186, %v188
    %v190 = vrot.slane %v176, %v189
    %v191 = vcombine.high %v183, %v183
    %v192 = vcombine.high %v190, %v190
    %v193 = vcombine.high %v173, %v173
    %v195 = vunpack.c.l.s4 1983009808
    %v196 = vunpack.c.0.s8 %v195
    %v197 = vlaneseq
    %v198 = vshrl.u32 %v197, 7
    %v199 = vsub.s32 %v196, %v198
    %v200 = vrot.slane %v173, %v199
    %v202 = vunpack.c.l.s4 1983009808
    %v203 = vunpack.c.0.s8 %v202
    %v204 = vlaneseq
    %v205 = vshrl.u32 %v204, 7
    %v206 = vsub.s32 %v203, %v205
    %v207 = vrot.slane %v193, %v206
    %v208 = vcombine.high %v200, %v200
    %v209 = vcombine.high %v207, %v207
    %v218 = vsel %vm69, %v183, -inf
    %v219 = vsel %vm69, %v191, -inf
    %v220 = vsel %vm69, %v190, -inf
    %v221 = vsel %vm69, %v192, -inf
    %v222 = vsel %vm69, %v200, -inf
    %v223 = vmax.f32 %v218, %v222
    %v224 = vsel %vm69, %v208, -inf
    %v225 = vmax.f32 %v219, %v224
    %v226 = vsel %vm69, %v207, -inf
    %v227 = vmax.f32 %v220, %v226
    %v228 = vsel %vm69, %v209, -inf
    %v229 = vmax.f32 %v221, %v228
    %v230 = vmax.f32 %v223, %v225
    %v231 = vmax.f32 %v227, %v229
    %v232 = vmax.f32 %v230, %v231
    %233 = vmax.xlane.f32.xlu0 %v232
    %v234 = vpop.xlane.xlu0 %233
    %v237 = vunpack.c.l.s4 269488144
    %v238 = vunpack.c.0.s8 %v237
    %v239 = vlaneseq
    %v240 = vshrl.u32 %v239, 7
    %v241 = vsub.s32 %v238, %v240
    %v242 = vrot.slane %v234, %v241
    %vm244 = vcmp.lt.f32.partialorder %v23, %v242
    %vm245 = vcmp.lt.f32.partialorder %v24, %v242
    %v246 = vsel %vm244, %v23, -inf
    %v247 = vsel %vm245, %v24, -inf
    %v250 = vcombine.high %v246, %v246
    %v252 = vunpack.c.l.s4 1983009808
    %v253 = vunpack.c.0.s8 %v252
    %v254 = vlaneseq
    %v255 = vshrl.u32 %v254, 7
    %v256 = vsub.s32 %v253, %v255
    %v257 = vrot.slane %v246, %v256
    %v259 = vunpack.c.l.s4 1983009808
    %v260 = vunpack.c.0.s8 %v259
    %v261 = vlaneseq
    %v262 = vshrl.u32 %v261, 7
    %v263 = vsub.s32 %v260, %v262
    %v264 = vrot.slane %v250, %v263
    %v265 = vcombine.high %v257, %v257
    %v266 = vcombine.high %v264, %v264
    %v267 = vcombine.high %v247, %v247
    %v269 = vunpack.c.l.s4 1983009808
    %v270 = vunpack.c.0.s8 %v269
    %v271 = vlaneseq
    %v272 = vshrl.u32 %v271, 7
    %v273 = vsub.s32 %v270, %v272
    %v274 = vrot.slane %v247, %v273
    %v276 = vunpack.c.l.s4 1983009808
    %v277 = vunpack.c.0.s8 %v276
    %v278 = vlaneseq
    %v279 = vshrl.u32 %v278, 7
    %v280 = vsub.s32 %v277, %v279
    %v281 = vrot.slane %v267, %v280
    %v282 = vcombine.high %v274, %v274
    %v283 = vcombine.high %v281, %v281
    %v292 = vsel %vm69, %v257, -inf
    %v293 = vsel %vm69, %v265, -inf
    %v294 = vsel %vm69, %v264, -inf
    %v295 = vsel %vm69, %v266, -inf
    %v296 = vsel %vm69, %v274, -inf
    %v297 = vmax.f32 %v292, %v296
    %v298 = vsel %vm69, %v282, -inf
    %v299 = vmax.f32 %v293, %v298
    %v300 = vsel %vm69, %v281, -inf
    %v301 = vmax.f32 %v294, %v300
    %v302 = vsel %vm69, %v283, -inf
    %v303 = vmax.f32 %v295, %v302
    %v304 = vmax.f32 %v297, %v299
    %v305 = vmax.f32 %v301, %v303
    %v306 = vmax.f32 %v304, %v305
    %307 = vmax.xlane.f32.xlu0 %v306
    %v308 = vpop.xlane.xlu0 %307
    %v311 = vunpack.c.l.s4 269488144
    %v312 = vunpack.c.0.s8 %v311
    %v313 = vlaneseq
    %v314 = vshrl.u32 %v313, 7
    %v315 = vsub.s32 %v312, %v314
    %v316 = vrot.slane %v308, %v315
    %vm318 = vcmp.lt.f32.partialorder %v23, %v316
    %vm319 = vcmp.lt.f32.partialorder %v24, %v316
    %v320 = vsel %vm318, %v23, -inf
    %v321 = vsel %vm319, %v24, -inf
    %v324 = vcombine.high %v320, %v320
    %v326 = vunpack.c.l.s4 1983009808
    %v327 = vunpack.c.0.s8 %v326
    %v328 = vlaneseq
    %v329 = vshrl.u32 %v328, 7
    %v330 = vsub.s32 %v327, %v329
    %v331 = vrot.slane %v320, %v330
    %v333 = vunpack.c.l.s4 1983009808
    %v334 = vunpack.c.0.s8 %v333
    %v335 = vlaneseq
    %v336 = vshrl.u32 %v335, 7
    %v337 = vsub.s32 %v334, %v336
    %v338 = vrot.slane %v324, %v337
    %v339 = vcombine.high %v331, %v331
    %v340 = vcombine.high %v338, %v338
    %v341 = vcombine.high %v321, %v321
    %v343 = vunpack.c.l.s4 1983009808
    %v344 = vunpack.c.0.s8 %v343
    %v345 = vlaneseq
    %v346 = vshrl.u32 %v345, 7
    %v347 = vsub.s32 %v344, %v346
    %v348 = vrot.slane %v321, %v347
    %v350 = vunpack.c.l.s4 1983009808
    %v351 = vunpack.c.0.s8 %v350
    %v352 = vlaneseq
    %v353 = vshrl.u32 %v352, 7
    %v354 = vsub.s32 %v351, %v353
    %v355 = vrot.slane %v341, %v354
    %v356 = vcombine.high %v348, %v348
    %v357 = vcombine.high %v355, %v355
    %v366 = vsel %vm69, %v331, -inf
    %v367 = vsel %vm69, %v339, -inf
    %v368 = vsel %vm69, %v338, -inf
    %v369 = vsel %vm69, %v340, -inf
    %v370 = vsel %vm69, %v348, -inf
    %v371 = vmax.f32 %v366, %v370
    %v372 = vsel %vm69, %v356, -inf
    %v373 = vmax.f32 %v367, %v372
    %v374 = vsel %vm69, %v355, -inf
    %v375 = vmax.f32 %v368, %v374
    %v376 = vsel %vm69, %v357, -inf
    %v377 = vmax.f32 %v369, %v376
    %v378 = vmax.f32 %v371, %v373
    %v379 = vmax.f32 %v375, %v377
    %v380 = vmax.f32 %v378, %v379
    %381 = vmax.xlane.f32.xlu0 %v380
    %v382 = vpop.xlane.xlu0 %381
    %v385 = vunpack.c.l.s4 269488144
    %v386 = vunpack.c.0.s8 %v385
    %v387 = vlaneseq
    %v388 = vshrl.u32 %v387, 7
    %v389 = vsub.s32 %v386, %v388
    %v390 = vrot.slane %v382, %v389
    %vm392 = vcmp.ge.f32.partialorder %v23, %v390
    %vm393 = vcmp.ge.f32.partialorder %v24, %v390
    %v394 = vsel %vm392, %v21, 0.0
    %v395 = vsel %vm393, %v22, 0.0
    %396 = vst [vmem:[#allocation5] sm:$0xff] %v394
    %397 = vst [vmem:[#allocation5 + $0x8] sm:$0xff] %v395
    // Predicated region
    $region10: #{tpu_custom_call.1} parent=1 // pred_check
      _
    $region11: #{tpu_custom_call.1} parent=1 // pred_check_branch
      %399 = sbr.rel (0) target = $region13
    $region12: #{tpu_custom_call.1} parent=1 // pred_region
      %s401 = ssub.s32 256, 256
      %402 = vsyncadd [#allocation4], %s401
      %s404 = sshll.u32 [#allocation5], 4
      %s405 = int_to_ptr.vmem [resolvable:$true] %s404
      %407 = dma.vmem_to_hbm [thread:$0]  %s405, 256, %s1, [#allocation4]
    $region13: #{tpu_custom_call.1} parent=1 // pred_fallthru
      _
    // Predicated region
    $region14: #{tpu_custom_call.1} parent=1 // pred_check
      _
    $region15: #{tpu_custom_call.1} parent=1 // pred_check_branch
      %409 = sbr.rel (0) target = $region17
    $region16: #{tpu_custom_call.1} parent=1 // pred_region
      %410 = dma.done [#allocation4], 256
    $region17: #{tpu_custom_call.1} parent=1 // pred_fallthru
      _
    %411 = vsyncpa [#allocation3], 1
    %412 = vsyncpa [#allocation4], 1

</llo_original>
